<compile_context>
chip_gen: v7x
topology: tpu7x:2x2x1
jax: 0.10.0
libtpu: 0.0.40
codegen_flags: <defaults>
</compile_context>

<pallas_src>
import jax
import jax.numpy as jnp
from jax.experimental import pallas as pl
from jax.experimental.pallas import tpu as pltpu


def _vmem_limit_bytes() -> int:
    """Per-generation scoped-VMEM limit (v7x: 64 MiB physical; v5e/v6e: 128 MiB)."""
    try:
        cap = pltpu.get_tpu_info().vmem_capacity_bytes
    except Exception:
        cap = 64 * 1024 * 1024  # conservative default (v7x-sized)
    return min((int(cap) * 3) // 4, 96 * 1024 * 1024)


def _choose_tile_hw(hw: int, rows: int, itemsize: int, tile_budget: int) -> int:
    """Largest lane-dense tile of the HW axis whose (rows, t) slab fits the budget.

    Prefers divisors of `hw` that are multiples of max(128, 512B/itemsize) so each
    strided HBM DMA row stays >= 512 B and every store is an unmasked, dense vst.
    """
    if rows * hw * itemsize <= tile_budget:
        return hw
    unit = max(128, -(-512 // itemsize))            # >=512 B per DMA row
    max_t = max(128, tile_budget // (rows * itemsize))
    for step in (unit, 128):
        t = (max_t // step) * step
        while t >= step:
            if hw % t == 0:                          # divisor -> no partial last block
                return t
            t -= step
    # No divisor found (general path only): multiple of 128, partial last block masked.
    return min(hw, max(128, (max_t // 128) * 128))


def shuffle_block(x: jax.Array, groups: int) -> jax.Array:
    """Channel shuffle: [N,C,H,W] -> [N,g,C/g,H,W] -> [N,C/g,g,H,W] -> [N,C,H,W]."""
    N, C, H, W = x.shape
    g = int(groups)
    assert C % g == 0, "channels must be divisible by groups"
    if g == 1:
        return x                                     # identity shuffle
    cpg = C // g
    HW = H * W
    itemsize = jnp.dtype(x.dtype).itemsize

    vmem_limit = _vmem_limit_bytes()
    tile_budget = vmem_limit // 6                    # in+out, double-buffered, + headroom

    if HW % 128 == 0:
        # ---------- Fast path: permutation done entirely by DMA addressing ----------
        # Input viewed (free reshape) as (N, g, cpg, HW): grid step (n, i, hw)
        # reads the contiguous slab of input group i.
        # Output viewed as (N, cpg, g*HW) -- the free view of the shuffled result:
        # the same data lands as a dense (cpg, t_hw) block at lane offset i*HW.
        # Kernel body is one full-density copy; both VMEM tiles are (cpg, t_hw) dense.
        t_hw = _choose_tile_hw(HW, cpg, itemsize, tile_budget)
        tile_bytes = cpg * t_hw * itemsize
        vmem_limit = max(vmem_limit, 4 * tile_bytes + (2 << 20))
        blocks_per_group = HW // t_hw
        grid = (N, g, blocks_per_group)

        x4 = x.reshape(N, g, cpg, HW)                # free reshape of contiguous dims

        def copy_kernel(x_ref, o_ref):
            # x_ref: (1, 1, cpg, t_hw), o_ref: (1, cpg, t_hw) -- dense sublane slabs.
            o_ref[0, :, :] = x_ref[0, 0, :, :]

        out = pl.pallas_call(
            copy_kernel,
            out_shape=jax.ShapeDtypeStruct((N, cpg, g * HW), x.dtype),
            grid=grid,
            in_specs=[pl.BlockSpec((1, 1, cpg, t_hw),
                                   lambda n, i, hw: (n, i, 0, hw))],
            out_specs=pl.BlockSpec((1, cpg, t_hw),
                                   lambda n, i, hw: (n, 0, i * blocks_per_group + hw)),
            compiler_params=pltpu.CompilerParams(
                dimension_semantics=("parallel", "parallel", "parallel"),
                vmem_limit_bytes=vmem_limit,
            ),
        )(x4)
        return out.reshape(N, C, H, W)

    # ---------- General path: HW not a multiple of 128 ----------
    # Whole-C lane-dense slabs; the shuffle is a single dense sublane permutation
    # in VMEM (reshape + swapaxes on non-lane dims), not per-channel vld/vst copies.
    # TODO(synk): for HW < 128 the trailing dim is still a masked partial vst;
    # packing several batches' HW into one lane-dense last dim would fix that.
    t_hw = _choose_tile_hw(HW, C, itemsize, tile_budget)
    tile_bytes = C * t_hw * itemsize
    vmem_limit = max(vmem_limit, 4 * tile_bytes + (2 << 20))
    x3 = x.reshape(N, C, HW)

    def shuffle_kernel(x_ref, o_ref):
        xb = x_ref[0]                                # (C, t_hw)
        t = xb.shape[-1]
        o_ref[0] = jnp.swapaxes(xb.reshape(g, cpg, t), 0, 1).reshape(C, t)

    out = pl.pallas_call(
        shuffle_kernel,
        out_shape=jax.ShapeDtypeStruct((N, C, HW), x.dtype),
        grid=(N, pl.cdiv(HW, t_hw)),
        in_specs=[pl.BlockSpec((1, C, t_hw), lambda n, hw: (n, 0, hw))],
        out_specs=pl.BlockSpec((1, C, t_hw), lambda n, hw: (n, 0, hw)),
        compiler_params=pltpu.CompilerParams(
            dimension_semantics=("parallel", "parallel"),
            vmem_limit_bytes=vmem_limit,
        ),
    )(x3)
    return out.reshape(N, C, H, W)


if __name__ == "__main__":
    key = jax.random.PRNGKey(0)
    N, C, H, W = 2, 4, 16, 16
    groups = 2

    x = jax.random.normal(key, (N, C, H, W), dtype=jnp.float32)

    out = shuffle_block(x, groups)
    out = jax.block_until_ready(out)

    # Pure-JAX reference matching the PyTorch view/permute/view semantics.
    ref = (
        x.reshape(N, groups, C // groups, H, W)
        .transpose(0, 2, 1, 3, 4)
        .reshape(N, C, H, W)
    )

    assert out.shape == (N, C, H, W)
    assert out.dtype == x.dtype
    assert jnp.array_equal(out, ref), "Pallas channel shuffle mismatch vs reference"

    print("KERNEL_OK")
</pallas_src>

<mosaic_0001>
module attributes {stable_mosaic.version = 11 : i64} {
  func.func @copy_kernel(%arg0: i32, %arg1: i32, %arg2: i32, %arg3: memref<1x1x2x256xf32, #tpu.memory_space<vmem>>, %arg4: memref<1x2x256xf32, #tpu.memory_space<vmem>>) attributes {dimension_semantics = [#tpu.dimension_semantics<parallel>, #tpu.dimension_semantics<parallel>, #tpu.dimension_semantics<parallel>], iteration_bounds = array<i64: 2, 2, 1>, scalar_prefetch = 0 : i64, scratch_operands = 0 : i64, tpu.core_type = #tpu.core_type<tc>, window_params = [{transform_indices = @transform_0, window_bounds = array<i64: 1, 1, 2, 256>}, {transform_indices = @transform_1, window_bounds = array<i64: 1, 2, 256>}]} {
    %c0 = arith.constant 0 : index
    %c0_0 = arith.constant 0 : index
    %c0_1 = arith.constant 0 : index
    %c0_2 = arith.constant 0 : index
    %0 = vector.load %arg3[%c0, %c0_0, %c0_1, %c0_2] : memref<1x1x2x256xf32, #tpu.memory_space<vmem>>, vector<1x1x2x256xf32>
    %1 = vector.shape_cast %0 : vector<1x1x2x256xf32> to vector<2x256xf32>
    %c0_3 = arith.constant 0 : index
    %c0_4 = arith.constant 0 : index
    %c0_5 = arith.constant 0 : index
    %2 = vector.load %arg4[%c0_3, %c0_4, %c0_5] : memref<1x2x256xf32, #tpu.memory_space<vmem>>, vector<1x2x256xf32>
    %3 = vector.shape_cast %2 : vector<1x2x256xf32> to vector<2x256xf32>
    %4 = vector.shape_cast %1 : vector<2x256xf32> to vector<1x2x256xf32>
    tpu.vector_store %arg4[%c0_3, %c0_4, %c0_5], %4 {strides = array<i32>} : memref<1x2x256xf32, #tpu.memory_space<vmem>>, vector<1x2x256xf32>,
    return
  }
  func.func @transform_0(%arg0: i32, %arg1: i32, %arg2: i32) -> (i32, i32, i32, i32) {
    %c0_i32 = arith.constant 0 : i32
    %c0_i32_0 = arith.constant 0 : i32
    return %arg0, %arg1, %c0_i32, %arg2 : i32, i32, i32, i32
  }
  func.func @transform_1(%arg0: i32, %arg1: i32, %arg2: i32) -> (i32, i32, i32) {
    %c1_i32 = arith.constant 1 : i32
    %0 = arith.muli %arg1, %c1_i32 : i32
    %1 = arith.addi %0, %arg2 : i32
    %c0_i32 = arith.constant 0 : i32
    %c0_i32_0 = arith.constant 0 : i32
    return %arg0, %c0_i32, %1 : i32, i32, i32
  }
}

</mosaic_0001>

<llo_original>
// kernel: tpu_custom_call.1
$region0: #{tpu_custom_call.1}
  #allocation0 [shape = 'u32[]', space=smem, size = 0x4, offset = 0x4, fixed_abs, tag = 'smem constant byte address 0x4 - core index']
  #allocation1 [shape = 'u32[144,128]{1,0:T(1,128)}', space=vmem, size = 0x12000, scoped, tag = 'internal scratch']
  %s0 = inlined_call_operand.hbm [shape: f32[2,2,2,256], index: 0, kind: input, shape index: {}]
  %s1 = inlined_call_operand.hbm [shape: f32[2,2,512], index: 1, kind: output, shape index: {}]
  %s2 = sld [smem:[#allocation0]]
  $region41: #{tpu_custom_call.1} parent=0
    _
  %s4 = ssub.s32 1, %s2
  %s5 = scalar_select 0, %s4, %s2
  $region1: #{tpu_custom_call.1} parent=0
    #allocation2 [shape = 'u8[4096]{0}', space=vmem, size = 0x1000, scoped, tag = 'input window, operand 0']
    #allocation3 [shape = 's32[2]{0}', space=sflag, size = 0x8, scoped, tag = 'scoped memory for tpu_custom_call.1']
    #allocation4 [shape = 's32[2]{0}', space=sflag, size = 0x8, scoped, tag = 'scoped memory for tpu_custom_call.1']
    #allocation5 [shape = 'u8[4096]{0}', space=vmem, size = 0x1000, scoped, tag = 'output window, operand 0']
    %6 = vsyncpa [#allocation3], 0
    %s7 = scalar_lea.sflag [#allocation3], 1
    %8 = vsyncpa %s7, 0
    %9 = vsyncpa [#allocation4], 0
    %s10 = scalar_lea.sflag [#allocation4], 1
    %11 = vsyncpa %s10, 0
    loop: start=0, step=1, limit=6
    $region2: #{tpu_custom_call.1} parent=1 // loop_pre_header
      _
    $region3: #{tpu_custom_call.1} parent=1 // loop_header
      %s13 = sphi 0, %s17
      %p14 = scmp.ge.s32.totalorder %s13, 6
      %s20 = sphi 0, %s39
      %s21 = sphi 0, %s35
      %s22 = sphi 0, %s31
      %s23 = sphi 0, %s20
      %s24 = sphi 0, %s21
      %s25 = sphi 0, %s22
      %s26 = sphi 0, %s23
      %s27 = sphi 0, %s24
      %s28 = sphi 0, %s25
      %s46 = sphi 0, %s48
      %s49 = sphi 0, %s46
      %s50 = sphi 0, %s49
      %s66 = sphi 0, %s50
      %s76 = sphi 0, %s78
      %s79 = sphi 0, %s76
      %s80 = sphi 0, %s79
      %s96 = sphi 0, %s80
    $region4: #{tpu_custom_call.1} parent=1 // loop_header_branch
      %16 = sbr.rel (%p14) target = $region8
    $region5: #{tpu_custom_call.1} parent=1 // loop_body
      %s18 = ssub.s32 %s13, 1
      %s19 = ssub.s32 %s13, 2
      %s29 = sadd.s32 1, %s22
      %p30 = scmp.ge.s32.totalorder %s29, 1
      %s31 = scalar_select %p30, 0, %s29
      %s32 = sadd.s32 1, %s21
      %s33 = scalar_select %p30, %s32, %s21
      %p34 = scmp.ge.s32.totalorder %s33, 2
      %s35 = scalar_select %p34, 0, %s33
      %s36 = sadd.s32 1, %s20
      %s37 = scalar_select %p34, %s36, %s20
      %p38 = scmp.ge.s32.totalorder %s37, 2
      %s39 = scalar_select %p38, 0, %s37
      %s40 = ssub.s32 %s20, %s39
      %s41 = ssub.s32 %s21, %s35
      %s42 = sor.u32 %s40, %s41
      %s43 = ssub.s32 %s22, %s31
      %s44 = sor.u32 %s42, %s43
      %p45 = scmp.eq.s32.totalorder %s44, 0
      %s47 = sadd.s32 %s46, 1
      %s48 = scalar_select %p45, %s46, %s47
      %p51 = pneg %p45
      %p52 = scmp.eq.s32.totalorder %s13, 3
      %p53 = por %p51, %p52
      %p54 = scmp.ne.s32.totalorder %s46, %s49
      %p55 = scmp.eq.s32.totalorder %s13, 0
      %p56 = por %p54, %p55
      %p57 = scmp.ne.s32.totalorder %s46, %s49
      %p58 = scmp.eq.s32.totalorder %s18, 3
      %p59 = por %p57, %p58
      %p60 = scmp.ne.s32.totalorder %s49, %s50
      %p61 = scmp.eq.s32.totalorder %s18, 0
      %p62 = por %p60, %p61
      %p63 = scmp.ne.s32.totalorder %s49, %s50
      %p64 = scmp.eq.s32.totalorder %s19, 3
      %p65 = por %p63, %p64
      %p67 = scmp.ne.s32.totalorder %s50, %s66
      %p68 = scmp.eq.s32.totalorder %s19, 0
      %p69 = por %p67, %p68
      %s70 = sadd.s32 %s21, %s22
      %s71 = sadd.s32 %s35, %s31
      %s72 = ssub.s32 %s20, %s39
      %s73 = ssub.s32 %s70, %s71
      %s74 = sor.u32 %s72, %s73
      %p75 = scmp.eq.s32.totalorder %s74, 0
      %s77 = sadd.s32 %s76, 1
      %s78 = scalar_select %p75, %s76, %s77
      %p81 = pneg %p75
      %p82 = scmp.eq.s32.totalorder %s13, 3
      %p83 = por %p81, %p82
      %p84 = scmp.ne.s32.totalorder %s76, %s79
      %p85 = scmp.eq.s32.totalorder %s13, 0
      %p86 = por %p84, %p85
      %p87 = scmp.ne.s32.totalorder %s76, %s79
      %p88 = scmp.eq.s32.totalorder %s18, 3
      %p89 = por %p87, %p88
      %p90 = scmp.ne.s32.totalorder %s79, %s80
      %p91 = scmp.eq.s32.totalorder %s18, 0
      %p92 = por %p90, %p91
      %p93 = scmp.ne.s32.totalorder %s79, %s80
      %p94 = scmp.eq.s32.totalorder %s19, 3
      %p95 = por %p93, %p94
      %p97 = scmp.ne.s32.totalorder %s80, %s96
      %p98 = scmp.eq.s32.totalorder %s19, 0
      %p99 = por %p97, %p98
      %p100 = scmp.le.s32.totalorder 1, %s13
      %p101 = scmp.lt.s32.totalorder %s13, 5
      %p102 = pnand %p100, %p101
      %p103 = pneg %p102
      // Predicated region
      $region9: #{tpu_custom_call.1} parent=5 // pred_check
        _
      $region10: #{tpu_custom_call.1} parent=5 // pred_check_branch
        %105 = sbr.rel (%p102) target = $region12
      $region11: #{tpu_custom_call.1} parent=5 // pred_region
        %s106 = ssub.s32 %s13, 1
      $region12: #{tpu_custom_call.1} parent=5 // pred_fallthru
        _
      %p107 = scmp.lt.s32.totalorder %s13, 4
      // Predicated region
      $region13: #{tpu_custom_call.1} parent=5 // pred_check
        %p108 = pneg %p107
      $region14: #{tpu_custom_call.1} parent=5 // pred_check_branch
        %110 = sbr.rel (%p108) target = $region16
      $region15: #{tpu_custom_call.1} parent=5 // pred_region
        // Predicated region
        $region17: #{tpu_custom_call.1} parent=15 // pred_check
          %p111 = pneg %p56
        $region18: #{tpu_custom_call.1} parent=15 // pred_check_branch
          %113 = sbr.rel (%p111) target = $region20
        $region19: #{tpu_custom_call.1} parent=15 // pred_region
          %s114 = sand.u32 %s46, 1
          %s115 = scalar_lea.sflag [#allocation3], %s114
          %s116 = sand.u32 %s46, 1
          %s117 = smul.addr %s116, 4
          %s118 = scalar_lea.vmem [#allocation2], %s117
          %s119 = smul.u32 2, %s22
          %s121 = ssub.s32 64, 64
          %122 = vsyncadd %s115, %s121
          %s123 = smul.addr %s21, 2
          %s124 = sadd.s32 %s119, %s123
          %s125 = smul.addr %s20, 4
          %s126 = sadd.s32 %s124, %s125
          %s127 = smul.addr %s126, 32
          %s128 = scalar_lea.hbm %s0, %s127
          %s130 = sshll.u32 %s118, 4
          %s131 = int_to_ptr.vmem [resolvable:$true] %s130
          %133 = dma.hbm_to_vmem [thread:$0]  %s128, 64, %s131, %s115
        $region20: #{tpu_custom_call.1} parent=15 // pred_fallthru
          _
      $region16: #{tpu_custom_call.1} parent=5 // pred_fallthru
        _
      %p134 = scmp.le.s32.totalorder 1, %s13
      %p135 = scmp.lt.s32.totalorder %s13, 5
      %p136 = pnand %p134, %p135
      %p137 = pneg %p136
      // Predicated region
      $region21: #{tpu_custom_call.1} parent=5 // pred_check
        _
      $region22: #{tpu_custom_call.1} parent=5 // pred_check_branch
        %139 = sbr.rel (%p136) target = $region24
      $region23: #{tpu_custom_call.1} parent=5 // pred_region
        %s140 = ssub.s32 %s13, 1
        %s141 = sand.u32 %s49, 1
        %s142 = scalar_lea.sflag [#allocation3], %s141
        %s143 = sand.u32 %s49, 1
        %s144 = smul.addr %s143, 4
        %s145 = scalar_lea.vmem [#allocation2], %s144
        // Predicated region
        $region25: #{tpu_custom_call.1} parent=23 // pred_check
          %p146 = pneg %p62
        $region26: #{tpu_custom_call.1} parent=23 // pred_check_branch
          %148 = sbr.rel (%p146) target = $region28
        $region27: #{tpu_custom_call.1} parent=23 // pred_region
          %149 = dma.done %s142, 64
        $region28: #{tpu_custom_call.1} parent=23 // pred_fallthru
          _
        %s150 = sand.u32 %s49, 1
        %s151 = scalar_lea.sflag [#allocation3], %s150
        %s152 = sand.u32 %s49, 1
        %s153 = smul.addr %s152, 4
        %s154 = scalar_lea.vmem [#allocation2], %s153
        %p155 = pneg %p62
        %p156 = pneg %p59
        %p157 = pneg %p92
        %p158 = pneg %p89
        %s159 = sand.u32 %s79, 1
        %s160 = scalar_lea.sflag [#allocation4], %s159
        %s161 = sand.u32 %s79, 1
        %s162 = smul.addr %s161, 4
        %s163 = scalar_lea.vmem [#allocation5], %s162
        %s164 = smul.u32 2, %s25
        %s165 = sadd.s32 %s24, %s25
        %s166 = smul.u32 2, %s165
        %v167 = vld [vmem:[%s145] sm:$0xf]
        %168 = vst [vmem:[%s163] sm:$0xf] %v167
        %s169 = sand.u32 %s79, 1
        %s170 = scalar_lea.sflag [#allocation4], %s169
        %s171 = sand.u32 %s79, 1
        %s172 = smul.addr %s171, 4
        %s173 = scalar_lea.vmem [#allocation5], %s172
        // Predicated region
        $region29: #{tpu_custom_call.1} parent=23 // pred_check
          %p174 = pneg %p89
        $region30: #{tpu_custom_call.1} parent=23 // pred_check_branch
          %176 = sbr.rel (%p174) target = $region32
        $region31: #{tpu_custom_call.1} parent=23 // pred_region
          %s177 = sadd.s32 %s24, %s25
          %s178 = smul.u32 2, %s177
          %s180 = ssub.s32 64, 64
          %181 = vsyncadd %s170, %s180
          %s182 = smul.addr %s23, 4
          %s183 = sadd.s32 %s178, %s182
          %s184 = smul.addr %s183, 32
          %s185 = scalar_lea.hbm %s1, %s184
          %s187 = sshll.u32 %s173, 4
          %s188 = int_to_ptr.vmem [resolvable:$true] %s187
          %190 = dma.vmem_to_hbm [thread:$0]  %s188, 64, %s185, %s170
        $region32: #{tpu_custom_call.1} parent=23 // pred_fallthru
          _
      $region24: #{tpu_custom_call.1} parent=5 // pred_fallthru
        _
      %p191 = scmp.le.s32.totalorder 2, %s13
      // Predicated region
      $region33: #{tpu_custom_call.1} parent=5 // pred_check
        %p192 = pneg %p191
      $region34: #{tpu_custom_call.1} parent=5 // pred_check_branch
        %194 = sbr.rel (%p192) target = $region36
      $region35: #{tpu_custom_call.1} parent=5 // pred_region
        %s195 = ssub.s32 %s13, 2
        // Predicated region
        $region37: #{tpu_custom_call.1} parent=35 // pred_check
          %p196 = pneg %p95
        $region38: #{tpu_custom_call.1} parent=35 // pred_check_branch
          %198 = sbr.rel (%p196) target = $region40
        $region39: #{tpu_custom_call.1} parent=35 // pred_region
          %s199 = sand.u32 %s80, 1
          %s200 = scalar_lea.sflag [#allocation4], %s199
          %s201 = sand.u32 %s80, 1
          %s202 = smul.addr %s201, 4
          %s203 = scalar_lea.vmem [#allocation5], %s202
          %204 = dma.done %s200, 64
        $region40: #{tpu_custom_call.1} parent=35 // pred_fallthru
          _
      $region36: #{tpu_custom_call.1} parent=5 // pred_fallthru
        _
    $region6: #{tpu_custom_call.1} parent=1 // loop_footer
      %s17 = sadd.s32 1, %s13
    $region7: #{tpu_custom_call.1} parent=1 // loop_footer_branch
      %12 = sbr.rel target = $region3
    $region8: #{tpu_custom_call.1} parent=1 // loop_exit
      _
    %205 = vsyncpa [#allocation3], 1
    %s206 = scalar_lea.sflag [#allocation3], 1
    %207 = vsyncpa %s206, 1
    %208 = vsyncpa [#allocation4], 1
    %s209 = scalar_lea.sflag [#allocation4], 1
    %210 = vsyncpa %s209, 1

</llo_original>
